<compile_context>
chip_gen: v5e
topology: v5e:2x2
jax: 0.10.0
libtpu: 0.0.40
codegen_flags: <defaults>
</compile_context>

<pallas_src>
import jax
import jax.numpy as jnp
from jax import lax
from jax.experimental import pallas as pl
from jax.experimental.pallas import tpu as pltpu

K = 3  # MaxPool2d(kernel_size=3) -> stride defaults to 3, padding=0, floor mode


def _round_up(x, m):
    return ((x + m - 1) // m) * m


def _chip_budgets():
    """(block_budget_bytes, vmem_limit_bytes, dual_core) per TPU generation."""
    try:
        kind = jax.devices()[0].device_kind.lower()
    except Exception:  # pragma: no cover - detection failure -> conservative path
        kind = ""
    if "v5" in kind or "v6" in kind:
        # 128 MiB physical VMEM, single TensorCore: go big, amortize the
        # ~0.35 us/grid-step overhead with large dense DMAs.
        return 64 * 1024 * 1024, 96 * 1024 * 1024, False
    # v7x (64 MiB per TC, 2 TCs) or unknown: conservative budget, keep both
    # TensorCores fed with an even number of grid steps.
    return 40 * 1024 * 1024, 48 * 1024 * 1024, True


def _pick_tiling(nc, h, w, ho, wo, itemsize, block_budget, dual_core):
    """Pick slabs-per-step from the (8,128)-padded VMEM footprint of the
    double-buffered input+output blocks; balance step count across TCs on v7x."""
    sub = {4: 8, 2: 16, 1: 32}.get(itemsize, 8)  # sublane packing per dtype width
    in_bytes = _round_up(h, sub) * _round_up(w, 128) * itemsize
    out_bytes = _round_up(ho, sub) * _round_up(wo, 128) * itemsize
    per_slab = 2 * (in_bytes + out_bytes)        # 2x: double-buffered pipeline
    tile = max(1, min(nc, block_budget // max(1, per_slab)))
    steps = pl.cdiv(nc, tile)
    if dual_core and nc >= 2:
        steps = max(steps, 2)                    # give both v7x TCs work
    if steps > 1 and steps % 2:
        steps += 1                               # even step count: no 2:1 imbalance
    tile = pl.cdiv(nc, steps)
    return tile, pl.cdiv(nc, tile)


def _max3(a, b, c):
    return jnp.maximum(jnp.maximum(a, b), c)


def maxpool2d_3x3(x):
    """Equivalent of nn.MaxPool2d(kernel_size=3, ceil_mode=False) on NCHW input."""
    N, C, H, W = x.shape
    Ho, Wo = H // K, W // K                      # floor mode (ceil_mode=False)
    if Ho == 0 or Wo == 0:                       # degenerate: H or W < kernel size
        return jnp.zeros((N, C, Ho, Wo), x.dtype)

    NC = N * C
    xr = x.reshape(NC, H, W)                     # merge of adjacent dims: no HBM copy
    itemsize = jnp.dtype(x.dtype).itemsize
    block_budget, vmem_limit, dual_core = _chip_budgets()
    tile_nc, grid = _pick_tiling(NC, H, W, Ho, Wo, itemsize, block_budget, dual_core)

    def kernel(x_ref, o_ref):
        # x_ref: (tile_nc, H, W) block with (H, W) on (sublane, lane).
        # The ragged edge (H % 3 rows / W % 3 cols) is never read.

        # --- Row windows: 3 sublane-strided loads (rows i, i+3, i+6, ...) and
        #     2 elementwise maxima on the VPU. O(1) ops regardless of Ho.
        r = _max3(
            x_ref[:, pl.ds(0, Ho, stride=K), :],
            x_ref[:, pl.ds(1, Ho, stride=K), :],
            x_ref[:, pl.ds(2, Ho, stride=K), :],
        )                                        # (tile_nc, Ho, W)

        # --- Column windows: sliding 3-wide max from 3 contiguous lane slices
        #     (2 VPU maxima), then decimate every 3rd lane. Lane-strided loads
        #     do not lower on TPU, so the stride-3 compress stays as Wo narrow
        #     slices feeding ONE concat and ONE dense store.
        m = _max3(r[:, :, 0:W - 2], r[:, :, 1:W - 1], r[:, :, 2:W])  # (tile_nc, Ho, W-2)
        cols = [m[:, :, K * j:K * j + 1] for j in range(Wo)]
        o_ref[...] = jnp.concatenate(cols, axis=-1)                  # (tile_nc, Ho, Wo)

    cost = pl.CostEstimate(
        flops=8 * NC * Ho * Wo,  # 8 maxima per output element
        transcendentals=0,
        bytes_accessed=NC * H * W * itemsize + NC * Ho * Wo * itemsize,
    )

    out = pl.pallas_call(
        kernel,
        out_shape=jax.ShapeDtypeStruct((NC, Ho, Wo), x.dtype),
        grid_spec=pltpu.PrefetchScalarGridSpec(
            num_scalar_prefetch=0,
            grid=(grid,),
            # Full-(H, W) input slabs: last two block dims equal the array dims
            # (satisfies the (8,128)/full-dim rule) and give large dense DMAs.
            # The trailing partial block over NC (if any) is masked by Pallas.
            in_specs=[pl.BlockSpec((tile_nc, H, W), lambda i: (i, 0, 0))],
            out_specs=pl.BlockSpec((tile_nc, Ho, Wo), lambda i: (i, 0, 0)),
        ),
        compiler_params=pltpu.CompilerParams(
            dimension_semantics=("parallel",),   # shards steps over both TCs on v7x
            vmem_limit_bytes=vmem_limit,
        ),
        cost_estimate=cost,
    )(xr)

    return out.reshape(N, C, Ho, Wo)


if __name__ == "__main__":
    # Tudui has no learnable parameters (just a MaxPool2d layer).
    key = jax.random.PRNGKey(0)
    x = jax.random.normal(key, (2, 4, 16, 16), dtype=jnp.float32)  # NCHW

    y = maxpool2d_3x3(x)
    y = jax.block_until_ready(y)

    # Independent reference (same semantics as torch.nn.MaxPool2d(3, ceil_mode=False)).
    y_ref = lax.reduce_window(
        x, -jnp.inf, lax.max,
        window_dimensions=(1, 1, K, K),
        window_strides=(1, 1, K, K),
        padding="VALID",
    )

    assert y.shape == (2, 4, 5, 5), y.shape
    assert jnp.allclose(y, y_ref), "mismatch vs reference maxpool"
    print("KERNEL_OK")
</pallas_src>

<mosaic_0001>
module attributes {stable_mosaic.version = 11 : i64} {
  func.func @kernel(%arg0: i32, %arg1: memref<4x16x16xf32, #tpu.memory_space<vmem>>, %arg2: memref<4x5x5xf32, #tpu.memory_space<vmem>>) attributes {dimension_semantics = [#tpu.dimension_semantics<parallel>], iteration_bounds = array<i64: 2>, scalar_prefetch = 0 : i64, scratch_operands = 0 : i64, tpu.core_type = #tpu.core_type<tc>, window_params = [{transform_indices = @transform_0, window_bounds = array<i64: 4, 16, 16>}, {transform_indices = @transform_1, window_bounds = array<i64: 4, 5, 5>}]} {
    %c0 = arith.constant 0 : index
    %c0_0 = arith.constant 0 : index
    %c0_1 = arith.constant 0 : index
    %0 = tpu.strided_load %arg1[%c0, %c0_0, %c0_1] {strides = array<i32: 1, 3, 1>} : memref<4x16x16xf32, #tpu.memory_space<vmem>>, vector<4x5x16xf32>
    %c0_2 = arith.constant 0 : index
    %c1 = arith.constant 1 : index
    %c0_3 = arith.constant 0 : index
    %1 = tpu.strided_load %arg1[%c0_2, %c1, %c0_3] {strides = array<i32: 1, 3, 1>} : memref<4x16x16xf32, #tpu.memory_space<vmem>>, vector<4x5x16xf32>
    %c0_4 = arith.constant 0 : index
    %c2 = arith.constant 2 : index
    %c0_5 = arith.constant 0 : index
    %2 = tpu.strided_load %arg1[%c0_4, %c2, %c0_5] {strides = array<i32: 1, 3, 1>} : memref<4x16x16xf32, #tpu.memory_space<vmem>>, vector<4x5x16xf32>
    %3 = arith.maximumf %0, %1 : vector<4x5x16xf32>
    %4 = arith.maximumf %3, %2 : vector<4x5x16xf32>
    %5 = vector.extract_strided_slice %4 {offsets = [0, 0, 0], sizes = [4, 5, 14], strides = [1, 1, 1]} : vector<4x5x16xf32> to vector<4x5x14xf32>
    %6 = vector.extract_strided_slice %4 {offsets = [0, 0, 1], sizes = [4, 5, 14], strides = [1, 1, 1]} : vector<4x5x16xf32> to vector<4x5x14xf32>
    %7 = vector.extract_strided_slice %4 {offsets = [0, 0, 2], sizes = [4, 5, 14], strides = [1, 1, 1]} : vector<4x5x16xf32> to vector<4x5x14xf32>
    %8 = arith.maximumf %5, %6 : vector<4x5x14xf32>
    %9 = arith.maximumf %8, %7 : vector<4x5x14xf32>
    %10 = vector.extract_strided_slice %9 {offsets = [0, 0, 0], sizes = [4, 5, 1], strides = [1, 1, 1]} : vector<4x5x14xf32> to vector<4x5x1xf32>
    %11 = vector.extract_strided_slice %9 {offsets = [0, 0, 3], sizes = [4, 5, 1], strides = [1, 1, 1]} : vector<4x5x14xf32> to vector<4x5x1xf32>
    %12 = vector.extract_strided_slice %9 {offsets = [0, 0, 6], sizes = [4, 5, 1], strides = [1, 1, 1]} : vector<4x5x14xf32> to vector<4x5x1xf32>
    %13 = vector.extract_strided_slice %9 {offsets = [0, 0, 9], sizes = [4, 5, 1], strides = [1, 1, 1]} : vector<4x5x14xf32> to vector<4x5x1xf32>
    %14 = vector.extract_strided_slice %9 {offsets = [0, 0, 12], sizes = [4, 5, 1], strides = [1, 1, 1]} : vector<4x5x14xf32> to vector<4x5x1xf32>
    %15 = tpu.concatenate %10, %11, %12, %13, %14 in 2 : vector<4x5x1xf32>, vector<4x5x1xf32>, vector<4x5x1xf32>, vector<4x5x1xf32>, vector<4x5x1xf32> -> vector<4x5x5xf32>
    %c0_6 = arith.constant 0 : index
    %c0_7 = arith.constant 0 : index
    %c0_8 = arith.constant 0 : index
    %16 = vector.load %arg2[%c0_6, %c0_7, %c0_8] : memref<4x5x5xf32, #tpu.memory_space<vmem>>, vector<4x5x5xf32>
    tpu.vector_store %arg2[%c0_6, %c0_7, %c0_8], %15 {strides = array<i32>} : memref<4x5x5xf32, #tpu.memory_space<vmem>>, vector<4x5x5xf32>,
    return
  }
  func.func @transform_0(%arg0: i32) -> (i32, i32, i32) {
    %c0_i32 = arith.constant 0 : i32
    %c0_i32_0 = arith.constant 0 : i32
    %c0_i32_1 = arith.constant 0 : i32
    return %arg0, %c0_i32, %c0_i32_0 : i32, i32, i32
  }
  func.func @transform_1(%arg0: i32) -> (i32, i32, i32) {
    %c0_i32 = arith.constant 0 : i32
    %c0_i32_0 = arith.constant 0 : i32
    %c0_i32_1 = arith.constant 0 : i32
    return %arg0, %c0_i32, %c0_i32_0 : i32, i32, i32
  }
}

</mosaic_0001>

<llo_original>
// kernel: tpu_custom_call.1
$region0: #{tpu_custom_call.1}
  #allocation0 [shape = 'u32[]', space=smem, size = 0x4, offset = 0x4, fixed_abs, tag = 'smem constant byte address 0x4 - core index']
  #allocation1 [shape = 'u32[72,128]{1,0:T(1,128)}', space=vmem, size = 0x9000, scoped, tag = 'internal scratch']
  %s0 = inlined_call_operand.hbm [shape: f32[8,16,16], index: 0, kind: input, shape index: {}]
  %s1 = inlined_call_operand.vmem [shape: f32[8,5,5], index: 1, kind: output, shape index: {}]
  %s2 = sld [smem:[#allocation0]]
  $region41: #{tpu_custom_call.1} parent=0
    _
  %s4 = ssub.s32 1, %s2
  %s5 = scalar_select 0, %s4, %s2
  $region1: #{tpu_custom_call.1} parent=0
    #allocation2 [shape = 'u8[65536]{0}', space=vmem, size = 0x10000, scoped, tag = 'input window, operand 0']
    #allocation3 [shape = 's32[2]{0}', space=sflag, size = 0x8, scoped, tag = 'scoped memory for tpu_custom_call.1']
    %6 = vsyncpa [#allocation3], 0
    %s7 = scalar_lea.sflag [#allocation3], 1
    %8 = vsyncpa %s7, 0
    loop: start=0, step=1, limit=4
    $region2: #{tpu_custom_call.1} parent=1 // loop_pre_header
      _
    $region3: #{tpu_custom_call.1} parent=1 // loop_header
      %s10 = sphi 0, %s14
      %p11 = scmp.ge.s32.totalorder %s10, 4
      %s20 = sphi 0, %s22
      %s23 = sphi 0, %s20
      %s24 = sphi 0, %s23
      %s40 = sphi 0, %s24
      %s46 = sphi 0, %s48
      %s49 = sphi 0, %s46
      %s50 = sphi 0, %s49
      %s66 = sphi 0, %s50
    $region4: #{tpu_custom_call.1} parent=1 // loop_header_branch
      %13 = sbr.rel (%p11) target = $region8
    $region5: #{tpu_custom_call.1} parent=1 // loop_body
      %s15 = ssub.s32 %s10, 1
      %s16 = ssub.s32 %s10, 2
      %s17 = sadd.s32 %s10, 1
      %s18 = ssub.s32 %s10, %s17
      %p19 = scmp.eq.s32.totalorder %s18, 0
      %s21 = sadd.s32 %s20, 1
      %s22 = scalar_select %p19, %s20, %s21
      %p25 = pneg %p19
      %p26 = scmp.eq.s32.totalorder %s10, 1
      %p27 = por %p25, %p26
      %p28 = scmp.ne.s32.totalorder %s20, %s23
      %p29 = scmp.eq.s32.totalorder %s10, 0
      %p30 = por %p28, %p29
      %p31 = scmp.ne.s32.totalorder %s20, %s23
      %p32 = scmp.eq.s32.totalorder %s15, 1
      %p33 = por %p31, %p32
      %p34 = scmp.ne.s32.totalorder %s23, %s24
      %p35 = scmp.eq.s32.totalorder %s15, 0
      %p36 = por %p34, %p35
      %p37 = scmp.ne.s32.totalorder %s23, %s24
      %p38 = scmp.eq.s32.totalorder %s16, 1
      %p39 = por %p37, %p38
      %p41 = scmp.ne.s32.totalorder %s24, %s40
      %p42 = scmp.eq.s32.totalorder %s16, 0
      %p43 = por %p41, %p42
      %s44 = ssub.s32 %s10, %s17
      %p45 = scmp.eq.s32.totalorder %s44, 0
      %s47 = sadd.s32 %s46, 1
      %s48 = scalar_select %p45, %s46, %s47
      %p51 = pneg %p45
      %p52 = scmp.eq.s32.totalorder %s10, 1
      %p53 = por %p51, %p52
      %p54 = scmp.ne.s32.totalorder %s46, %s49
      %p55 = scmp.eq.s32.totalorder %s10, 0
      %p56 = por %p54, %p55
      %p57 = scmp.ne.s32.totalorder %s46, %s49
      %p58 = scmp.eq.s32.totalorder %s15, 1
      %p59 = por %p57, %p58
      %p60 = scmp.ne.s32.totalorder %s49, %s50
      %p61 = scmp.eq.s32.totalorder %s15, 0
      %p62 = por %p60, %p61
      %p63 = scmp.ne.s32.totalorder %s49, %s50
      %p64 = scmp.eq.s32.totalorder %s16, 1
      %p65 = por %p63, %p64
      %p67 = scmp.ne.s32.totalorder %s50, %s66
      %p68 = scmp.eq.s32.totalorder %s16, 0
      %p69 = por %p67, %p68
      %p70 = scmp.le.s32.totalorder 1, %s10
      %p71 = scmp.lt.s32.totalorder %s10, 3
      %p72 = pnand %p70, %p71
      %p73 = pneg %p72
      // Predicated region
      $region9: #{tpu_custom_call.1} parent=5 // pred_check
        _
      $region10: #{tpu_custom_call.1} parent=5 // pred_check_branch
        %75 = sbr.rel (%p72) target = $region12
      $region11: #{tpu_custom_call.1} parent=5 // pred_region
        %s76 = ssub.s32 %s10, 1
      $region12: #{tpu_custom_call.1} parent=5 // pred_fallthru
        _
      %p77 = scmp.lt.s32.totalorder %s10, 2
      // Predicated region
      $region13: #{tpu_custom_call.1} parent=5 // pred_check
        %p78 = pneg %p77
      $region14: #{tpu_custom_call.1} parent=5 // pred_check_branch
        %80 = sbr.rel (%p78) target = $region16
      $region15: #{tpu_custom_call.1} parent=5 // pred_region
        // Predicated region
        $region17: #{tpu_custom_call.1} parent=15 // pred_check
          %p81 = pneg %p30
        $region18: #{tpu_custom_call.1} parent=15 // pred_check_branch
          %83 = sbr.rel (%p81) target = $region20
        $region19: #{tpu_custom_call.1} parent=15 // pred_region
          %s84 = sand.u32 %s20, 1
          %s85 = scalar_lea.sflag [#allocation3], %s84
          %s86 = sand.u32 %s20, 1
          %s87 = smul.addr %s86, 64
          %s88 = scalar_lea.vmem [#allocation2], %s87
          %s89 = smul.u32 4, %s10
          %91 = vsyncadd %s85, 0
          %s92 = smul.addr %s89, 2
          %s93 = smul.addr %s92, 8
          %s94 = scalar_lea.hbm %s0, %s93
          %s95 = sshll.u32 %s94, 4
          %s96 = int_to_ptr.hbm [resolvable:$true] %s95
          %s97 = sshll.u32 %s88, 4
          %s98 = int_to_ptr.vmem [resolvable:$true] %s97
          %103 = dma.hbm_to_vmem [thread:$0]  %s96, 1024, %s98, %s85, 128, 128, 8
        $region20: #{tpu_custom_call.1} parent=15 // pred_fallthru
          _
      $region16: #{tpu_custom_call.1} parent=5 // pred_fallthru
        _
      %p104 = scmp.le.s32.totalorder 1, %s10
      %p105 = scmp.lt.s32.totalorder %s10, 3
      %p106 = pnand %p104, %p105
      %p107 = pneg %p106
      // Predicated region
      $region21: #{tpu_custom_call.1} parent=5 // pred_check
        _
      $region22: #{tpu_custom_call.1} parent=5 // pred_check_branch
        %109 = sbr.rel (%p106) target = $region24
      $region23: #{tpu_custom_call.1} parent=5 // pred_region
        %s110 = ssub.s32 %s10, 1
        %s111 = sand.u32 %s23, 1
        %s112 = scalar_lea.sflag [#allocation3], %s111
        %s113 = sand.u32 %s23, 1
        %s114 = smul.addr %s113, 64
        %s115 = scalar_lea.vmem [#allocation2], %s114
        // Predicated region
        $region25: #{tpu_custom_call.1} parent=23 // pred_check
          %p116 = pneg %p36
        $region26: #{tpu_custom_call.1} parent=23 // pred_check_branch
          %118 = sbr.rel (%p116) target = $region28
        $region27: #{tpu_custom_call.1} parent=23 // pred_region
          %120 = dma.done %s112, 1024
        $region28: #{tpu_custom_call.1} parent=23 // pred_fallthru
          _
        %s121 = sand.u32 %s23, 1
        %s122 = scalar_lea.sflag [#allocation3], %s121
        %s123 = sand.u32 %s23, 1
        %s124 = smul.addr %s123, 64
        %s125 = scalar_lea.vmem [#allocation2], %s124
        %p126 = pneg %p36
        %p127 = pneg %p33
        %p128 = pneg %p62
        %p129 = pneg %p59
        %s130 = smul.u32 4, %s15
        %p131 = scmp.lt.s32.totalorder %s130, 7
        %s132 = scalar_select %p131, %s130, 7
        %s133 = smul.addr %s132, 8
        %s134 = scalar_lea.vmem %s1, %s133
        %s135 = smul.u32 4, %s15
        %s136 = smul.u32 4, %s15
        %p137 = scmp.lt.s32.totalorder %s136, 7
        %s138 = scalar_select %p137, %s136, 7
        %s139 = smul.addr %s138, 8
        %s140 = scalar_lea.vmem %s1, %s139
        %s141 = smul.u32 4, %s15
        %v142 = vld [vmem:[%s115] ss:$3 sm:$0x1f]
        %s143 = scalar_lea.vmem %s115, 16 [#allocation2]
        %v144 = vld [vmem:[%s143] ss:$3 sm:$0x1f]
        %s145 = scalar_lea.vmem %s115, 32 [#allocation2]
        %v146 = vld [vmem:[%s145] ss:$3 sm:$0x1f]
        %s147 = scalar_lea.vmem %s115, 48 [#allocation2]
        %v148 = vld [vmem:[%s147] ss:$3 sm:$0x1f]
        %s149 = scalar_lea.vmem %s115, 1 [#allocation2]
        %v150 = vld [vmem:[%s149] ss:$3 sm:$0x1f]
        %s151 = scalar_lea.vmem %s115, 17 [#allocation2]
        %v152 = vld [vmem:[%s151] ss:$3 sm:$0x1f]
        %s153 = scalar_lea.vmem %s115, 33 [#allocation2]
        %v154 = vld [vmem:[%s153] ss:$3 sm:$0x1f]
        %s155 = scalar_lea.vmem %s115, 49 [#allocation2]
        %v156 = vld [vmem:[%s155] ss:$3 sm:$0x1f]
        %s157 = scalar_lea.vmem %s115, 2 [#allocation2]
        %v158 = vld [vmem:[%s157] ss:$3 sm:$0x1f]
        %s159 = scalar_lea.vmem %s115, 18 [#allocation2]
        %v160 = vld [vmem:[%s159] ss:$3 sm:$0x1f]
        %s161 = scalar_lea.vmem %s115, 34 [#allocation2]
        %v162 = vld [vmem:[%s161] ss:$3 sm:$0x1f]
        %s163 = scalar_lea.vmem %s115, 50 [#allocation2]
        %v164 = vld [vmem:[%s163] ss:$3 sm:$0x1f]
        %v165 = vmax.f32 %v142, %v150
        %v166 = vmax.f32 %v144, %v152
        %v167 = vmax.f32 %v146, %v154
        %v168 = vmax.f32 %v148, %v156
        %v169 = vmax.f32 %v165, %v158
        %v170 = vmax.f32 %v166, %v160
        %v171 = vmax.f32 %v167, %v162
        %v172 = vmax.f32 %v168, %v164
        %177 = vrot.lane.b32.xlu0 %v169, 127
        %v178 = vpop.permute.xlu0 %177
        %179 = vrot.lane.b32.xlu0 %v170, 127
        %v180 = vpop.permute.xlu0 %179
        %181 = vrot.lane.b32.xlu0 %v171, 127
        %v182 = vpop.permute.xlu0 %181
        %183 = vrot.lane.b32.xlu0 %v172, 127
        %v184 = vpop.permute.xlu0 %183
        %v189 = vmax.f32 %v169, %v178
        %v190 = vmax.f32 %v170, %v180
        %v191 = vmax.f32 %v171, %v182
        %v192 = vmax.f32 %v172, %v184
        %193 = vrot.lane.b32.xlu0 %v169, 126
        %v194 = vpop.permute.xlu0 %193
        %195 = vrot.lane.b32.xlu0 %v170, 126
        %v196 = vpop.permute.xlu0 %195
        %197 = vrot.lane.b32.xlu0 %v171, 126
        %v198 = vpop.permute.xlu0 %197
        %199 = vrot.lane.b32.xlu0 %v172, 126
        %v200 = vpop.permute.xlu0 %199
        %v205 = vmax.f32 %v189, %v194
        %v206 = vmax.f32 %v190, %v196
        %v207 = vmax.f32 %v191, %v198
        %v208 = vmax.f32 %v192, %v200
        %213 = vrot.lane.b32.xlu0 %v205, 126
        %v214 = vpop.permute.xlu0 %213
        %215 = vrot.lane.b32.xlu0 %v206, 126
        %v216 = vpop.permute.xlu0 %215
        %217 = vrot.lane.b32.xlu0 %v207, 126
        %v218 = vpop.permute.xlu0 %217
        %219 = vrot.lane.b32.xlu0 %v208, 126
        %v220 = vpop.permute.xlu0 %219
        %225 = vrot.lane.b32.xlu0 %v205, 124
        %v226 = vpop.permute.xlu0 %225
        %227 = vrot.lane.b32.xlu0 %v206, 124
        %v228 = vpop.permute.xlu0 %227
        %229 = vrot.lane.b32.xlu0 %v207, 124
        %v230 = vpop.permute.xlu0 %229
        %231 = vrot.lane.b32.xlu0 %v208, 124
        %v232 = vpop.permute.xlu0 %231
        %237 = vrot.lane.b32.xlu0 %v205, 122
        %v238 = vpop.permute.xlu0 %237
        %239 = vrot.lane.b32.xlu0 %v206, 122
        %v240 = vpop.permute.xlu0 %239
        %241 = vrot.lane.b32.xlu0 %v207, 122
        %v242 = vpop.permute.xlu0 %241
        %243 = vrot.lane.b32.xlu0 %v208, 122
        %v244 = vpop.permute.xlu0 %243
        %249 = vrot.lane.b32.xlu0 %v205, 120
        %v250 = vpop.permute.xlu0 %249
        %251 = vrot.lane.b32.xlu0 %v206, 120
        %v252 = vpop.permute.xlu0 %251
        %253 = vrot.lane.b32.xlu0 %v207, 120
        %v254 = vpop.permute.xlu0 %253
        %255 = vrot.lane.b32.xlu0 %v208, 120
        %v256 = vpop.permute.xlu0 %255
        %vm261 = vcmask 7168
        %v262 = vsel %vm261, %v205, %v214
        %v263 = vsel %vm261, %v206, %v216
        %v264 = vsel %vm261, %v207, %v218
        %v265 = vsel %vm261, %v208, %v220
        %vm266 = vcmask 15360
        %v267 = vsel %vm266, %v262, %v226
        %v268 = vsel %vm266, %v263, %v228
        %v269 = vsel %vm266, %v264, %v230
        %v270 = vsel %vm266, %v265, %v232
        %vm271 = vcmask 23552
        %v272 = vsel %vm271, %v267, %v238
        %v273 = vsel %vm271, %v268, %v240
        %v274 = vsel %vm271, %v269, %v242
        %v275 = vsel %vm271, %v270, %v244
        %vm276 = vcmask 31744
        %v277 = vsel %vm276, %v272, %v250
        %v278 = vsel %vm276, %v273, %v252
        %v279 = vsel %vm276, %v274, %v254
        %v280 = vsel %vm276, %v275, %v256
        %vm281 = vcmask 36864
        %282 = vst.msk [vmem:[%s140] sm:$0x1f] %vm281, %v277
        %283 = vst.msk [vmem:[%s140 + $0x8] sm:$0x1f] %vm281, %v278
        %284 = vst.msk [vmem:[%s140 + $0x10] sm:$0x1f] %vm281, %v279
        %285 = vst.msk [vmem:[%s140 + $0x18] sm:$0x1f] %vm281, %v280
        %s286 = smul.u32 4, %s15
        %p287 = scmp.lt.s32.totalorder %s286, 7
        %s288 = scalar_select %p287, %s286, 7
        %s289 = smul.addr %s288, 8
        %s290 = scalar_lea.vmem %s1, %s289
        // Predicated region
        $region29: #{tpu_custom_call.1} parent=23 // pred_check
          %p291 = pneg %p59
        $region30: #{tpu_custom_call.1} parent=23 // pred_check_branch
          %293 = sbr.rel (%p291) target = $region32
        $region31: #{tpu_custom_call.1} parent=23 // pred_region
          %s294 = smul.u32 4, %s15
        $region32: #{tpu_custom_call.1} parent=23 // pred_fallthru
          _
      $region24: #{tpu_custom_call.1} parent=5 // pred_fallthru
        _
      %p295 = scmp.le.s32.totalorder 2, %s10
      // Predicated region
      $region33: #{tpu_custom_call.1} parent=5 // pred_check
        %p296 = pneg %p295
      $region34: #{tpu_custom_call.1} parent=5 // pred_check_branch
        %298 = sbr.rel (%p296) target = $region36
      $region35: #{tpu_custom_call.1} parent=5 // pred_region
        %s299 = ssub.s32 %s10, 2
        // Predicated region
        $region37: #{tpu_custom_call.1} parent=35 // pred_check
          %p300 = pneg %p65
        $region38: #{tpu_custom_call.1} parent=35 // pred_check_branch
          %302 = sbr.rel (%p300) target = $region40
        $region39: #{tpu_custom_call.1} parent=35 // pred_region
          %s303 = smul.u32 4, %s16
          %p304 = scmp.lt.s32.totalorder %s303, 7
          %s305 = scalar_select %p304, %s303, 7
          %s306 = smul.addr %s305, 8
          %s307 = scalar_lea.vmem %s1, %s306
        $region40: #{tpu_custom_call.1} parent=35 // pred_fallthru
          _
      $region36: #{tpu_custom_call.1} parent=5 // pred_fallthru
        _
    $region6: #{tpu_custom_call.1} parent=1 // loop_footer
      %s14 = sadd.s32 1, %s10
    $region7: #{tpu_custom_call.1} parent=1 // loop_footer_branch
      %9 = sbr.rel target = $region3
    $region8: #{tpu_custom_call.1} parent=1 // loop_exit
      _
    %308 = vsyncpa [#allocation3], 1
    %s309 = scalar_lea.sflag [#allocation3], 1
    %310 = vsyncpa %s309, 1

</llo_original>
